<compile_context>
chip_gen: v6e
topology: v6e:2x2x1
jax: 0.10.0
libtpu: 0.0.40
codegen_flags: <defaults>
</compile_context>

<pallas_src>
import functools

import jax
import jax.numpy as jnp
from jax import lax
from jax.experimental import pallas as pl
from jax.experimental.pallas import tpu as pltpu

KSIZE = 3  # kernel_size=3, padding=1 (PyTorch module default)


def _roll_lanes(a, shift):
    """Cyclic shift along the last (lane) axis; lane extent is always %128==0."""
    n = a.shape[-1]
    shift = shift % n
    if shift == 0:
        return a
    return pltpu.roll(a, shift, axis=a.ndim - 1)  # XLU rotate (idle slot here)


def _spatial_attention_kernel(w_ref, col_ref, x_ref, o_ref, *, H, W, unroll):
    # w_ref:   SMEM f32[19]  = conv weight (2,3,3) row-major followed by bias.
    # col_ref: VMEM int32[1, HWp] = column index of each lane (precomputed).
    # x_ref:   VMEM [C, HWp] (one batch element, lane-dense, zero-padded lanes)
    # o_ref:   VMEM [C, HWp]
    C, HWp = x_ref.shape
    n_grp = C // 8            # full 8-row (sublane-group) chunks
    rem = C - n_grp * 8

    # ---- pass 1: streamed channel sum / max with (8, HWp) partial carries ----
    if n_grp:
        def reduce_body(i, carry):
            s8, m8 = carry
            start = pl.multiple_of(i * 8, 8)
            blk = x_ref[pl.ds(start, 8), :].astype(jnp.float32)
            return s8 + blk, jnp.maximum(m8, blk)

        init = (jnp.zeros((8, HWp), jnp.float32),
                jnp.full((8, HWp), -jnp.inf, jnp.float32))
        s8, m8 = lax.fori_loop(0, n_grp, reduce_body, init, unroll=unroll)
        # Single cross-sublane reduce after the loop.
        sum_map = jnp.sum(s8, axis=0, keepdims=True)
        max_map = jnp.max(m8, axis=0, keepdims=True)
        if rem:
            blk = x_ref[pl.ds(n_grp * 8, rem), :].astype(jnp.float32)
            sum_map = sum_map + jnp.sum(blk, axis=0, keepdims=True)
            max_map = jnp.maximum(max_map, jnp.max(blk, axis=0, keepdims=True))
    else:
        blk = x_ref[...].astype(jnp.float32)       # tiny C: one shot
        sum_map = jnp.sum(blk, axis=0, keepdims=True)
        max_map = jnp.max(blk, axis=0, keepdims=True)

    avg_map = sum_map * jnp.float32(1.0 / C)

    # ---- 3x3 "same" conv (2 in-ch -> 1 out-ch) on flattened (1, HWp) maps ----
    # tap (di, dj): out[i, j] += w[di+1, dj+1] * in[i+di, j+dj], zero padded.
    flat = lax.broadcasted_iota(jnp.int32, (1, HWp), 1)
    col = col_ref[...]
    # Boundary masks, built once (pad lanes never feed valid lanes).
    row_up_ok = flat >= W                 # source row i-1 exists
    row_dn_ok = flat < (H - 1) * W        # source row i+1 exists
    col_lf_ok = col >= 1                  # source col j-1 exists
    col_rt_ok = col <= (W - 2)            # source col j+1 exists

    bias = w_ref[2 * KSIZE * KSIZE]
    acc = jnp.zeros((1, HWp), jnp.float32) + bias
    for ki in range(KSIZE):
        for kj in range(KSIZE):
            di, dj = ki - 1, kj - 1
            w_avg = w_ref[0 * KSIZE * KSIZE + ki * KSIZE + kj]
            w_max = w_ref[1 * KSIZE * KSIZE + ki * KSIZE + kj]
            # Roll commutes with the scalar weighting -> one roll per tap.
            comb = w_avg * avg_map + w_max * max_map
            shift = (-(di * W + dj)) % HWp
            tap = _roll_lanes(comb, shift)
            valid = None
            if di == -1:
                valid = row_up_ok
            elif di == 1:
                valid = row_dn_ok
            if dj == -1:
                valid = col_lf_ok if valid is None else (valid & col_lf_ok)
            elif dj == 1:
                valid = col_rt_ok if valid is None else (valid & col_rt_ok)
            if valid is not None:
                tap = jnp.where(valid, tap, 0.0)
            acc = acc + tap

    # sigmoid(acc); exact reciprocal keeps the 1e-4 tolerance.
    mask = pl.reciprocal(1.0 + jnp.exp(-acc), approx=False)   # (1, HWp) f32

    # ---- pass 2: streamed scale + lane-dense store (re-reads VMEM only) ------
    # Native-dtype multiply (skips per-element f32 up/down casts for bf16);
    # mask cast + broadcast hoisted out of the loop.
    mask_x = mask.astype(o_ref.dtype)
    if n_grp:
        mask_b = jnp.broadcast_to(mask_x, (8, HWp))

        def scale_body(i, _):
            start = pl.multiple_of(i * 8, 8)
            o_ref[pl.ds(start, 8), :] = x_ref[pl.ds(start, 8), :] * mask_b
            return 0

        lax.fori_loop(0, n_grp, scale_body, 0, unroll=unroll)
    if rem:
        start = n_grp * 8
        o_ref[pl.ds(start, rem), :] = (
            x_ref[pl.ds(start, rem), :] * jnp.broadcast_to(mask_x, (rem, HWp)))


def spatial_attention(x, conv_w, conv_b):
    """x: (N, C, H, W); conv_w: (1, 2, 3, 3); conv_b: (1,)."""
    N, C, H, W = x.shape
    HW = H * W
    HWp = ((HW + 127) // 128) * 128          # lane-dense padded spatial extent

    # Flatten conv params into one small SMEM-resident vector.
    w_flat = jnp.concatenate(
        [conv_w.reshape(-1).astype(jnp.float32),
         conv_b.reshape(-1).astype(jnp.float32)]
    )  # (19,)

    # Lane-dense layout, zero-padded so all rolls/stores stay unmasked.
    x2 = x.reshape(N, C, HW)
    if HWp != HW:
        x2 = jnp.pad(x2, ((0, 0), (0, 0), (0, HWp - HW)))

    # Integer column index per lane (host side; avoids in-kernel f32 div/floor).
    col_idx = (jnp.arange(HWp, dtype=jnp.int32) % jnp.int32(W)).reshape(1, HWp)

    # Modest unroll of the 8-row streaming loops (divisor of the trip count).
    n_grp = C // 8
    unroll = next(u for u in (8, 4, 2, 1) if n_grp % u == 0) if n_grp else 1

    # ---- chip-aware VMEM budget -------------------------------------------
    try:
        cap = int(pltpu.get_tpu_info().vmem_capacity_bytes)
    except Exception:
        cap = 64 * 1024 * 1024               # conservative fallback (v7x/TC)
    budget = (cap * 85) // 100               # leave headroom for Mosaic scratch

    slab_bytes = C * HWp * x.dtype.itemsize
    work_bytes = (64 + 8 * unroll) * HWp * 4 + (1 << 20)   # carries/maps/temps

    out_kwargs = {}
    if 4 * slab_bytes + work_bytes > budget and 3 * slab_bytes + work_bytes <= budget:
        # v7x-sized slabs: drop the output double-buffer (serializes writeback
        # between batch steps only) so the whole-slab path still fits.
        out_kwargs["pipeline_mode"] = pl.Buffered(1)
    # TODO(synk): C-tiled two-pass fallback when even 3x whole-slab buffering
    # exceeds the budget.

    vmem_bytes = int(min(budget,
                         max(16 << 20,
                             (3 if out_kwargs else 4) * slab_bytes + work_bytes)))

    kernel = functools.partial(_spatial_attention_kernel, H=H, W=W, unroll=unroll)

    out2 = pl.pallas_call(
        kernel,
        out_shape=jax.ShapeDtypeStruct((N, C, HWp), x.dtype),
        grid=(N,),
        in_specs=[
            pl.BlockSpec(memory_space=pltpu.SMEM),                 # conv params
            pl.BlockSpec((1, HWp), lambda n: (0, 0)),              # column map
            pl.BlockSpec((None, C, HWp), lambda n: (n, 0, 0)),     # x slab
        ],
        out_specs=pl.BlockSpec((None, C, HWp), lambda n: (n, 0, 0), **out_kwargs),
        compiler_params=pltpu.CompilerParams(
            dimension_semantics=("parallel",),
            vmem_limit_bytes=vmem_bytes,
        ),
    )(w_flat, col_idx, x2)

    return out2[:, :, :HW].reshape(N, C, H, W)


def spatial_attention_ref(x, conv_w, conv_b):
    """Pure-JAX reference for the correctness check."""
    avg_mask = jnp.mean(x, axis=1, keepdims=True)
    max_mask = jnp.max(x, axis=1, keepdims=True)
    mask = jnp.concatenate([avg_mask, max_mask], axis=1)         # (N, 2, H, W)
    conv = jax.lax.conv_general_dilated(
        mask, conv_w, window_strides=(1, 1), padding="SAME",
        dimension_numbers=("NCHW", "OIHW", "NCHW"),
    ) + conv_b.reshape(1, 1, 1, 1)
    return x * jax.nn.sigmoid(conv)


if __name__ == "__main__":
    key = jax.random.PRNGKey(0)
    kx, kw, kb, kx2 = jax.random.split(key, 4)

    # Deterministic synthetic conv params (shapes of nn.Conv2d(2, 1, 3, padding=1)).
    fan_in = 2 * KSIZE * KSIZE
    bound = 1.0 / (fan_in ** 0.5)
    conv_w = jax.random.uniform(kw, (1, 2, KSIZE, KSIZE), jnp.float32, -bound, bound)
    conv_b = jax.random.uniform(kb, (1,), jnp.float32, -bound, bound)

    # Case 1: HW % 128 == 0, small C (tail-only reduction path).
    x1 = jax.random.normal(kx, (2, 4, 16, 16), dtype=jnp.float32)
    out1 = jax.block_until_ready(spatial_attention(x1, conv_w, conv_b))
    ref1 = spatial_attention_ref(x1, conv_w, conv_b)
    assert out1.shape == x1.shape
    assert jnp.allclose(out1, ref1, atol=1e-4, rtol=1e-4)

    # Case 2: HW % 128 != 0 (lane padding) + chunked channel loop + remainder.
    x2 = jax.random.normal(kx2, (1, 52, 12, 12), dtype=jnp.float32)
    out2 = jax.block_until_ready(spatial_attention(x2, conv_w, conv_b))
    ref2 = spatial_attention_ref(x2, conv_w, conv_b)
    assert out2.shape == x2.shape
    assert jnp.allclose(out2, ref2, atol=1e-4, rtol=1e-4)

    print("KERNEL_OK")
</pallas_src>

<mosaic_0001>
module attributes {stable_mosaic.version = 11 : i64} {
  func.func @_spatial_attention_kernel(%arg0: i32, %arg1: memref<19xf32, #tpu.memory_space<smem>>, %arg2: memref<1x256xi32, #tpu.memory_space<vmem>>, %arg3: memref<1x4x256xf32, #tpu.memory_space<vmem>>, %arg4: memref<1x4x256xf32, #tpu.memory_space<vmem>>) attributes {dimension_semantics = [#tpu.dimension_semantics<parallel>], iteration_bounds = array<i64: 2>, scalar_prefetch = 0 : i64, scratch_operands = 0 : i64, tpu.core_type = #tpu.core_type<tc>, window_params = [{transform_indices = @transform_0, window_bounds = array<i64: 19>}, {pipeline_mode = #tpu.pipeline_mode<synchronous>, transform_indices = @transform_1, window_bounds = array<i64: 1, 256>}, {transform_indices = @transform_2, window_bounds = array<i64: 1, 4, 256>}, {transform_indices = @transform_3, window_bounds = array<i64: 1, 4, 256>}]} {
    %c0 = arith.constant 0 : index
    %c0_0 = arith.constant 0 : index
    %c0_1 = arith.constant 0 : index
    %0 = vector.load %arg3[%c0, %c0_0, %c0_1] : memref<1x4x256xf32, #tpu.memory_space<vmem>>, vector<1x4x256xf32>
    %1 = vector.shape_cast %0 : vector<1x4x256xf32> to vector<4x256xf32>
    %cst = arith.constant dense<0.000000e+00> : vector<256xf32>
    %2 = vector.multi_reduction <add>, %1, %cst [0] : vector<4x256xf32> to vector<256xf32>
    %3 = vector.shape_cast %2 : vector<256xf32> to vector<1x256xf32>
    %cst_2 = arith.constant dense<0xFF800000> : vector<256xf32>
    %4 = vector.multi_reduction <maximumf>, %1, %cst_2 [0] : vector<4x256xf32> to vector<256xf32>
    %5 = vector.shape_cast %4 : vector<256xf32> to vector<1x256xf32>
    %cst_3 = arith.constant 2.500000e-01 : f32
    %6 = vector.broadcast %cst_3 : f32 to vector<1x256xf32>
    %7 = arith.mulf %3, %6 : vector<1x256xf32>
    %8 = tpu.iota {dimensions = array<i32: 1>} : vector<1x256xi32>
    %c0_4 = arith.constant 0 : index
    %c0_5 = arith.constant 0 : index
    %9 = vector.load %arg2[%c0_4, %c0_5] : memref<1x256xi32, #tpu.memory_space<vmem>>, vector<1x256xi32>
    %c16_i32 = arith.constant 16 : i32
    %10 = vector.broadcast %c16_i32 : i32 to vector<1x256xi32>
    %11 = arith.cmpi sge, %8, %10 : vector<1x256xi32>
    %c240_i32 = arith.constant 240 : i32
    %12 = vector.broadcast %c240_i32 : i32 to vector<1x256xi32>
    %13 = arith.cmpi slt, %8, %12 : vector<1x256xi32>
    %c1_i32 = arith.constant 1 : i32
    %14 = vector.broadcast %c1_i32 : i32 to vector<1x256xi32>
    %15 = arith.cmpi sge, %9, %14 : vector<1x256xi32>
    %c14_i32 = arith.constant 14 : i32
    %16 = vector.broadcast %c14_i32 : i32 to vector<1x256xi32>
    %17 = arith.cmpi sle, %9, %16 : vector<1x256xi32>
    %c18 = arith.constant 18 : index
    %18 = memref.load %arg1[%c18] : memref<19xf32, #tpu.memory_space<smem>>
    %cst_6 = arith.constant 0.000000e+00 : f32
    %19 = vector.broadcast %cst_6 : f32 to vector<1x256xf32>
    %20 = vector.broadcast %18 : f32 to vector<1x256xf32>
    %21 = arith.addf %19, %20 : vector<1x256xf32>
    %c0_7 = arith.constant 0 : index
    %22 = memref.load %arg1[%c0_7] : memref<19xf32, #tpu.memory_space<smem>>
    %c9 = arith.constant 9 : index
    %23 = memref.load %arg1[%c9] : memref<19xf32, #tpu.memory_space<smem>>
    %24 = vector.broadcast %22 : f32 to vector<1x256xf32>
    %25 = arith.mulf %24, %7 : vector<1x256xf32>
    %26 = vector.broadcast %23 : f32 to vector<1x256xf32>
    %27 = arith.mulf %26, %5 : vector<1x256xf32>
    %28 = arith.addf %25, %27 : vector<1x256xf32>
    %c17_i32 = arith.constant 17 : i32
    %29 = tpu.dynamic_rotate %28 by %c17_i32 dim 1 : vector<1x256xf32>, i32 -> vector<1x256xf32>
    %30 = arith.andi %11, %15 : vector<1x256xi1>
    %cst_8 = arith.constant 0.000000e+00 : f32
    %31 = vector.broadcast %cst_8 : f32 to vector<1x256xf32>
    %32 = arith.select %30, %29, %31 : vector<1x256xi1>, vector<1x256xf32>
    %33 = arith.addf %21, %32 : vector<1x256xf32>
    %c1 = arith.constant 1 : index
    %34 = memref.load %arg1[%c1] : memref<19xf32, #tpu.memory_space<smem>>
    %c10 = arith.constant 10 : index
    %35 = memref.load %arg1[%c10] : memref<19xf32, #tpu.memory_space<smem>>
    %36 = vector.broadcast %34 : f32 to vector<1x256xf32>
    %37 = arith.mulf %36, %7 : vector<1x256xf32>
    %38 = vector.broadcast %35 : f32 to vector<1x256xf32>
    %39 = arith.mulf %38, %5 : vector<1x256xf32>
    %40 = arith.addf %37, %39 : vector<1x256xf32>
    %c16_i32_9 = arith.constant 16 : i32
    %41 = tpu.dynamic_rotate %40 by %c16_i32_9 dim 1 : vector<1x256xf32>, i32 -> vector<1x256xf32>
    %cst_10 = arith.constant 0.000000e+00 : f32
    %42 = vector.broadcast %cst_10 : f32 to vector<1x256xf32>
    %43 = arith.select %11, %41, %42 : vector<1x256xi1>, vector<1x256xf32>
    %44 = arith.addf %33, %43 : vector<1x256xf32>
    %c2 = arith.constant 2 : index
    %45 = memref.load %arg1[%c2] : memref<19xf32, #tpu.memory_space<smem>>
    %c11 = arith.constant 11 : index
    %46 = memref.load %arg1[%c11] : memref<19xf32, #tpu.memory_space<smem>>
    %47 = vector.broadcast %45 : f32 to vector<1x256xf32>
    %48 = arith.mulf %47, %7 : vector<1x256xf32>
    %49 = vector.broadcast %46 : f32 to vector<1x256xf32>
    %50 = arith.mulf %49, %5 : vector<1x256xf32>
    %51 = arith.addf %48, %50 : vector<1x256xf32>
    %c15_i32 = arith.constant 15 : i32
    %52 = tpu.dynamic_rotate %51 by %c15_i32 dim 1 : vector<1x256xf32>, i32 -> vector<1x256xf32>
    %53 = arith.andi %11, %17 : vector<1x256xi1>
    %cst_11 = arith.constant 0.000000e+00 : f32
    %54 = vector.broadcast %cst_11 : f32 to vector<1x256xf32>
    %55 = arith.select %53, %52, %54 : vector<1x256xi1>, vector<1x256xf32>
    %56 = arith.addf %44, %55 : vector<1x256xf32>
    %c3 = arith.constant 3 : index
    %57 = memref.load %arg1[%c3] : memref<19xf32, #tpu.memory_space<smem>>
    %c12 = arith.constant 12 : index
    %58 = memref.load %arg1[%c12] : memref<19xf32, #tpu.memory_space<smem>>
    %59 = vector.broadcast %57 : f32 to vector<1x256xf32>
    %60 = arith.mulf %59, %7 : vector<1x256xf32>
    %61 = vector.broadcast %58 : f32 to vector<1x256xf32>
    %62 = arith.mulf %61, %5 : vector<1x256xf32>
    %63 = arith.addf %60, %62 : vector<1x256xf32>
    %c1_i32_12 = arith.constant 1 : i32
    %64 = tpu.dynamic_rotate %63 by %c1_i32_12 dim 1 : vector<1x256xf32>, i32 -> vector<1x256xf32>
    %cst_13 = arith.constant 0.000000e+00 : f32
    %65 = vector.broadcast %cst_13 : f32 to vector<1x256xf32>
    %66 = arith.select %15, %64, %65 : vector<1x256xi1>, vector<1x256xf32>
    %67 = arith.addf %56, %66 : vector<1x256xf32>
    %c4 = arith.constant 4 : index
    %68 = memref.load %arg1[%c4] : memref<19xf32, #tpu.memory_space<smem>>
    %c13 = arith.constant 13 : index
    %69 = memref.load %arg1[%c13] : memref<19xf32, #tpu.memory_space<smem>>
    %70 = vector.broadcast %68 : f32 to vector<1x256xf32>
    %71 = arith.mulf %70, %7 : vector<1x256xf32>
    %72 = vector.broadcast %69 : f32 to vector<1x256xf32>
    %73 = arith.mulf %72, %5 : vector<1x256xf32>
    %74 = arith.addf %71, %73 : vector<1x256xf32>
    %75 = arith.addf %67, %74 : vector<1x256xf32>
    %c5 = arith.constant 5 : index
    %76 = memref.load %arg1[%c5] : memref<19xf32, #tpu.memory_space<smem>>
    %c14 = arith.constant 14 : index
    %77 = memref.load %arg1[%c14] : memref<19xf32, #tpu.memory_space<smem>>
    %78 = vector.broadcast %76 : f32 to vector<1x256xf32>
    %79 = arith.mulf %78, %7 : vector<1x256xf32>
    %80 = vector.broadcast %77 : f32 to vector<1x256xf32>
    %81 = arith.mulf %80, %5 : vector<1x256xf32>
    %82 = arith.addf %79, %81 : vector<1x256xf32>
    %c255_i32 = arith.constant 255 : i32
    %83 = tpu.dynamic_rotate %82 by %c255_i32 dim 1 : vector<1x256xf32>, i32 -> vector<1x256xf32>
    %cst_14 = arith.constant 0.000000e+00 : f32
    %84 = vector.broadcast %cst_14 : f32 to vector<1x256xf32>
    %85 = arith.select %17, %83, %84 : vector<1x256xi1>, vector<1x256xf32>
    %86 = arith.addf %75, %85 : vector<1x256xf32>
    %c6 = arith.constant 6 : index
    %87 = memref.load %arg1[%c6] : memref<19xf32, #tpu.memory_space<smem>>
    %c15 = arith.constant 15 : index
    %88 = memref.load %arg1[%c15] : memref<19xf32, #tpu.memory_space<smem>>
    %89 = vector.broadcast %87 : f32 to vector<1x256xf32>
    %90 = arith.mulf %89, %7 : vector<1x256xf32>
    %91 = vector.broadcast %88 : f32 to vector<1x256xf32>
    %92 = arith.mulf %91, %5 : vector<1x256xf32>
    %93 = arith.addf %90, %92 : vector<1x256xf32>
    %c241_i32 = arith.constant 241 : i32
    %94 = tpu.dynamic_rotate %93 by %c241_i32 dim 1 : vector<1x256xf32>, i32 -> vector<1x256xf32>
    %95 = arith.andi %13, %15 : vector<1x256xi1>
    %cst_15 = arith.constant 0.000000e+00 : f32
    %96 = vector.broadcast %cst_15 : f32 to vector<1x256xf32>
    %97 = arith.select %95, %94, %96 : vector<1x256xi1>, vector<1x256xf32>
    %98 = arith.addf %86, %97 : vector<1x256xf32>
    %c7 = arith.constant 7 : index
    %99 = memref.load %arg1[%c7] : memref<19xf32, #tpu.memory_space<smem>>
    %c16 = arith.constant 16 : index
    %100 = memref.load %arg1[%c16] : memref<19xf32, #tpu.memory_space<smem>>
    %101 = vector.broadcast %99 : f32 to vector<1x256xf32>
    %102 = arith.mulf %101, %7 : vector<1x256xf32>
    %103 = vector.broadcast %100 : f32 to vector<1x256xf32>
    %104 = arith.mulf %103, %5 : vector<1x256xf32>
    %105 = arith.addf %102, %104 : vector<1x256xf32>
    %c240_i32_16 = arith.constant 240 : i32
    %106 = tpu.dynamic_rotate %105 by %c240_i32_16 dim 1 : vector<1x256xf32>, i32 -> vector<1x256xf32>
    %cst_17 = arith.constant 0.000000e+00 : f32
    %107 = vector.broadcast %cst_17 : f32 to vector<1x256xf32>
    %108 = arith.select %13, %106, %107 : vector<1x256xi1>, vector<1x256xf32>
    %109 = arith.addf %98, %108 : vector<1x256xf32>
    %c8 = arith.constant 8 : index
    %110 = memref.load %arg1[%c8] : memref<19xf32, #tpu.memory_space<smem>>
    %c17 = arith.constant 17 : index
    %111 = memref.load %arg1[%c17] : memref<19xf32, #tpu.memory_space<smem>>
    %112 = vector.broadcast %110 : f32 to vector<1x256xf32>
    %113 = arith.mulf %112, %7 : vector<1x256xf32>
    %114 = vector.broadcast %111 : f32 to vector<1x256xf32>
    %115 = arith.mulf %114, %5 : vector<1x256xf32>
    %116 = arith.addf %113, %115 : vector<1x256xf32>
    %c239_i32 = arith.constant 239 : i32
    %117 = tpu.dynamic_rotate %116 by %c239_i32 dim 1 : vector<1x256xf32>, i32 -> vector<1x256xf32>
    %118 = arith.andi %13, %17 : vector<1x256xi1>
    %cst_18 = arith.constant 0.000000e+00 : f32
    %119 = vector.broadcast %cst_18 : f32 to vector<1x256xf32>
    %120 = arith.select %118, %117, %119 : vector<1x256xi1>, vector<1x256xf32>
    %121 = arith.addf %109, %120 : vector<1x256xf32>
    %cst_19 = arith.constant 0.000000e+00 : f32
    %122 = vector.broadcast %cst_19 : f32 to vector<1x256xf32>
    %123 = arith.subf %122, %121 : vector<1x256xf32>
    %124 = math.exp %123 : vector<1x256xf32>
    %cst_20 = arith.constant 1.000000e+00 : f32
    %125 = vector.broadcast %cst_20 : f32 to vector<1x256xf32>
    %126 = arith.addf %125, %124 : vector<1x256xf32>
    %127 = tpu.reciprocal %126 : vector<1x256xf32> -> vector<1x256xf32>
    %c0_21 = arith.constant 0 : index
    %c0_22 = arith.constant 0 : index
    %c0_23 = arith.constant 0 : index
    %128 = vector.load %arg3[%c0_21, %c0_22, %c0_23] : memref<1x4x256xf32, #tpu.memory_space<vmem>>, vector<1x4x256xf32>
    %129 = vector.shape_cast %128 : vector<1x4x256xf32> to vector<4x256xf32>
    %130 = vector.shape_cast %127 : vector<1x256xf32> to vector<1x256xf32>
    %131 = vector.broadcast %130 : vector<1x256xf32> to vector<4x256xf32>
    %132 = arith.mulf %129, %131 : vector<4x256xf32>
    %c0_24 = arith.constant 0 : index
    %c0_25 = arith.constant 0 : index
    %c0_26 = arith.constant 0 : index
    %133 = vector.load %arg4[%c0_24, %c0_25, %c0_26] : memref<1x4x256xf32, #tpu.memory_space<vmem>>, vector<1x4x256xf32>
    %134 = vector.shape_cast %133 : vector<1x4x256xf32> to vector<4x256xf32>
    %135 = vector.shape_cast %132 : vector<4x256xf32> to vector<1x4x256xf32>
    tpu.vector_store %arg4[%c0_24, %c0_25, %c0_26], %135 {strides = array<i32>} : memref<1x4x256xf32, #tpu.memory_space<vmem>>, vector<1x4x256xf32>,
    return
  }
  func.func @transform_0(%arg0: i32) -> i32 {
    %c0_i32 = arith.constant 0 : i32
    %c0_i32_0 = arith.constant 0 : i32
    return %c0_i32 : i32
  }
  func.func @transform_1(%arg0: i32) -> (i32, i32) {
    %c0_i32 = arith.constant 0 : i32
    %c0_i32_0 = arith.constant 0 : i32
    %c0_i32_1 = arith.constant 0 : i32
    return %c0_i32, %c0_i32_0 : i32, i32
  }
  func.func @transform_2(%arg0: i32) -> (i32, i32, i32) {
    %c0_i32 = arith.constant 0 : i32
    %c0_i32_0 = arith.constant 0 : i32
    %c0_i32_1 = arith.constant 0 : i32
    return %arg0, %c0_i32, %c0_i32_0 : i32, i32, i32
  }
  func.func @transform_3(%arg0: i32) -> (i32, i32, i32) {
    %c0_i32 = arith.constant 0 : i32
    %c0_i32_0 = arith.constant 0 : i32
    %c0_i32_1 = arith.constant 0 : i32
    return %arg0, %c0_i32, %c0_i32_0 : i32, i32, i32
  }
}

</mosaic_0001>

<llo_original>
// kernel: tpu_custom_call.1
$region0: #{tpu_custom_call.1}
  #allocation0 [shape = 'u32[]', space=smem, size = 0x4, offset = 0x4, fixed_abs, tag = 'smem constant byte address 0x4 - core index']
  #allocation1 [shape = 'u32[144,128]{1,0:T(1,128)}', space=vmem, size = 0x12000, scoped, tag = 'internal scratch']
  %s0 = inlined_call_operand.hbm [shape: f32[19], index: 0, kind: input, shape index: {}]
  %s1 = inlined_call_operand.hbm [shape: s32[1,256], index: 1, kind: input, shape index: {}]
  %s2 = inlined_call_operand.hbm [shape: f32[2,4,256], index: 2, kind: input, shape index: {}]
  %s3 = inlined_call_operand.hbm [shape: f32[2,4,256], index: 3, kind: output, shape index: {}]
  %s4 = sld [smem:[#allocation0]]
  $region57: #{tpu_custom_call.1} parent=0
    _
  %s6 = ssub.s32 1, %s4
  %s7 = scalar_select 0, %s6, %s4
  $region1: #{tpu_custom_call.1} parent=0
    #allocation2 [shape = 'u8[512]{0}', space=smem, size = 0x200, scoped, tag = 'input window, operand 0, single buffered']
    #allocation3 [shape = 's32[2]{0}', space=sflag, size = 0x8, scoped, tag = 'scoped memory for tpu_custom_call.1']
    #allocation4 [shape = 's32[2]{0}', space=sflag, size = 0x8, scoped, tag = 'scoped memory for tpu_custom_call.1']
    #allocation5 [shape = 's32[2]{0}', space=sflag, size = 0x8, scoped, tag = 'scoped memory for tpu_custom_call.1']
    #allocation6 [shape = 'u8[1024]{0}', space=vmem, size = 0x400, scoped, tag = 'input window, operand 1, single buffered']
    #allocation7 [shape = 'u8[8192]{0}', space=vmem, size = 0x2000, scoped, tag = 'input window, operand 2']
    #allocation8 [shape = 's32[2]{0}', space=sflag, size = 0x8, scoped, tag = 'scoped memory for tpu_custom_call.1']
    #allocation9 [shape = 'u8[8192]{0}', space=vmem, size = 0x2000, scoped, tag = 'output window, operand 0']
    %8 = vsyncpa [#allocation5], 0
    %9 = vsyncpa [#allocation3], 0
    %10 = vsyncpa [#allocation8], 0
    %s11 = scalar_lea.sflag [#allocation8], 1
    %12 = vsyncpa %s11, 0
    %13 = vsyncpa [#allocation4], 0
    %s14 = scalar_lea.sflag [#allocation4], 1
    %15 = vsyncpa %s14, 0
    loop: start=0, step=1, limit=4
    $region2: #{tpu_custom_call.1} parent=1 // loop_pre_header
      _
    $region3: #{tpu_custom_call.1} parent=1 // loop_header
      %s17 = sphi 0, %s21
      %p18 = scmp.ge.s32.totalorder %s17, 4
      %s25 = sphi 0, %s25
      %s27 = sphi 0, %s25
      %s28 = sphi 0, %s27
      %s42 = sphi 0, %s28
      %s46 = sphi 0, %s46
      %s48 = sphi 0, %s46
      %s49 = sphi 0, %s48
      %s63 = sphi 0, %s49
      %s69 = sphi 0, %s71
      %s72 = sphi 0, %s69
      %s73 = sphi 0, %s72
      %s89 = sphi 0, %s73
      %s95 = sphi 0, %s97
      %s98 = sphi 0, %s95
      %s99 = sphi 0, %s98
      %s115 = sphi 0, %s99
    $region4: #{tpu_custom_call.1} parent=1 // loop_header_branch
      %20 = sbr.rel (%p18) target = $region8
    $region5: #{tpu_custom_call.1} parent=1 // loop_body
      %s22 = ssub.s32 %s17, 1
      %s23 = ssub.s32 %s17, 2
      %s24 = sadd.s32 %s17, 1
      %s26 = sadd.s32 %s25, 1
      %p29 = scmp.eq.s32.totalorder %s17, 1
      %p30 = scmp.ne.s32.totalorder %s25, %s27
      %p31 = scmp.eq.s32.totalorder %s17, 0
      %p32 = por %p30, %p31
      %p33 = scmp.ne.s32.totalorder %s25, %s27
      %p34 = scmp.eq.s32.totalorder %s22, 1
      %p35 = por %p33, %p34
      %p36 = scmp.ne.s32.totalorder %s27, %s28
      %p37 = scmp.eq.s32.totalorder %s22, 0
      %p38 = por %p36, %p37
      %p39 = scmp.ne.s32.totalorder %s27, %s28
      %p40 = scmp.eq.s32.totalorder %s23, 1
      %p41 = por %p39, %p40
      %p43 = scmp.ne.s32.totalorder %s28, %s42
      %p44 = scmp.eq.s32.totalorder %s23, 0
      %p45 = por %p43, %p44
      %s47 = sadd.s32 %s46, 1
      %p50 = scmp.eq.s32.totalorder %s17, 1
      %p51 = scmp.ne.s32.totalorder %s46, %s48
      %p52 = scmp.eq.s32.totalorder %s17, 0
      %p53 = por %p51, %p52
      %p54 = scmp.ne.s32.totalorder %s46, %s48
      %p55 = scmp.eq.s32.totalorder %s22, 1
      %p56 = por %p54, %p55
      %p57 = scmp.ne.s32.totalorder %s48, %s49
      %p58 = scmp.eq.s32.totalorder %s22, 0
      %p59 = por %p57, %p58
      %p60 = scmp.ne.s32.totalorder %s48, %s49
      %p61 = scmp.eq.s32.totalorder %s23, 1
      %p62 = por %p60, %p61
      %p64 = scmp.ne.s32.totalorder %s49, %s63
      %p65 = scmp.eq.s32.totalorder %s23, 0
      %p66 = por %p64, %p65
      %s67 = ssub.s32 %s17, %s24
      %p68 = scmp.eq.s32.totalorder %s67, 0
      %s70 = sadd.s32 %s69, 1
      %s71 = scalar_select %p68, %s69, %s70
      %p74 = pneg %p68
      %p75 = scmp.eq.s32.totalorder %s17, 1
      %p76 = por %p74, %p75
      %p77 = scmp.ne.s32.totalorder %s69, %s72
      %p78 = scmp.eq.s32.totalorder %s17, 0
      %p79 = por %p77, %p78
      %p80 = scmp.ne.s32.totalorder %s69, %s72
      %p81 = scmp.eq.s32.totalorder %s22, 1
      %p82 = por %p80, %p81
      %p83 = scmp.ne.s32.totalorder %s72, %s73
      %p84 = scmp.eq.s32.totalorder %s22, 0
      %p85 = por %p83, %p84
      %p86 = scmp.ne.s32.totalorder %s72, %s73
      %p87 = scmp.eq.s32.totalorder %s23, 1
      %p88 = por %p86, %p87
      %p90 = scmp.ne.s32.totalorder %s73, %s89
      %p91 = scmp.eq.s32.totalorder %s23, 0
      %p92 = por %p90, %p91
      %s93 = ssub.s32 %s17, %s24
      %p94 = scmp.eq.s32.totalorder %s93, 0
      %s96 = sadd.s32 %s95, 1
      %s97 = scalar_select %p94, %s95, %s96
      %p100 = pneg %p94
      %p101 = scmp.eq.s32.totalorder %s17, 1
      %p102 = por %p100, %p101
      %p103 = scmp.ne.s32.totalorder %s95, %s98
      %p104 = scmp.eq.s32.totalorder %s17, 0
      %p105 = por %p103, %p104
      %p106 = scmp.ne.s32.totalorder %s95, %s98
      %p107 = scmp.eq.s32.totalorder %s22, 1
      %p108 = por %p106, %p107
      %p109 = scmp.ne.s32.totalorder %s98, %s99
      %p110 = scmp.eq.s32.totalorder %s22, 0
      %p111 = por %p109, %p110
      %p112 = scmp.ne.s32.totalorder %s98, %s99
      %p113 = scmp.eq.s32.totalorder %s23, 1
      %p114 = por %p112, %p113
      %p116 = scmp.ne.s32.totalorder %s99, %s115
      %p117 = scmp.eq.s32.totalorder %s23, 0
      %p118 = por %p116, %p117
      %p119 = scmp.le.s32.totalorder 1, %s17
      %p120 = scmp.lt.s32.totalorder %s17, 3
      %p121 = pnand %p119, %p120
      %p122 = pneg %p121
      // Predicated region
      $region9: #{tpu_custom_call.1} parent=5 // pred_check
        _
      $region10: #{tpu_custom_call.1} parent=5 // pred_check_branch
        %124 = sbr.rel (%p121) target = $region12
      $region11: #{tpu_custom_call.1} parent=5 // pred_region
        %s125 = ssub.s32 %s17, 1
        // Predicated region
        $region13: #{tpu_custom_call.1} parent=11 // pred_check
          %p126 = pneg %p38
        $region14: #{tpu_custom_call.1} parent=11 // pred_check_branch
          %128 = sbr.rel (%p126) target = $region16
        $region15: #{tpu_custom_call.1} parent=11 // pred_region
          %s130 = ssub.s32 16, 16
          %131 = vsyncadd [#allocation5], %s130
          %134 = dma.hbm_to_smem %s0, 16, [#allocation2], [#allocation5]
        $region16: #{tpu_custom_call.1} parent=11 // pred_fallthru
          _
        // Predicated region
        $region17: #{tpu_custom_call.1} parent=11 // pred_check
          %p135 = pneg %p59
        $region18: #{tpu_custom_call.1} parent=11 // pred_check_branch
          %137 = sbr.rel (%p135) target = $region20
        $region19: #{tpu_custom_call.1} parent=11 // pred_region
          %s139 = ssub.s32 32, 32
          %140 = vsyncadd [#allocation3], %s139
          %s142 = sshll.u32 [#allocation6], 4
          %s143 = int_to_ptr.vmem [resolvable:$true] %s142
          %145 = dma.hbm_to_vmem [thread:$0]  %s1, 32, %s143, [#allocation3]
        $region20: #{tpu_custom_call.1} parent=11 // pred_fallthru
          _
      $region12: #{tpu_custom_call.1} parent=5 // pred_fallthru
        _
      %p146 = scmp.lt.s32.totalorder %s17, 2
      // Predicated region
      $region21: #{tpu_custom_call.1} parent=5 // pred_check
        %p147 = pneg %p146
      $region22: #{tpu_custom_call.1} parent=5 // pred_check_branch
        %149 = sbr.rel (%p147) target = $region24
      $region23: #{tpu_custom_call.1} parent=5 // pred_region
        // Predicated region
        $region25: #{tpu_custom_call.1} parent=23 // pred_check
          %p150 = pneg %p79
        $region26: #{tpu_custom_call.1} parent=23 // pred_check_branch
          %152 = sbr.rel (%p150) target = $region28
        $region27: #{tpu_custom_call.1} parent=23 // pred_region
          %s153 = sand.u32 %s69, 1
          %s154 = scalar_lea.sflag [#allocation8], %s153
          %s155 = sand.u32 %s69, 1
          %s156 = smul.addr %s155, 8
          %s157 = scalar_lea.vmem [#allocation7], %s156
          %s159 = ssub.s32 128, 128
          %160 = vsyncadd %s154, %s159
          %s161 = smul.addr %s17, 2
          %s162 = smul.addr %s161, 64
          %s163 = scalar_lea.hbm %s2, %s162
          %s165 = sshll.u32 %s157, 4
          %s166 = int_to_ptr.vmem [resolvable:$true] %s165
          %168 = dma.hbm_to_vmem [thread:$0]  %s163, 128, %s166, %s154
        $region28: #{tpu_custom_call.1} parent=23 // pred_fallthru
          _
      $region24: #{tpu_custom_call.1} parent=5 // pred_fallthru
        _
      %p169 = scmp.le.s32.totalorder 1, %s17
      %p170 = scmp.lt.s32.totalorder %s17, 3
      %p171 = pnand %p169, %p170
      %p172 = pneg %p171
      // Predicated region
      $region29: #{tpu_custom_call.1} parent=5 // pred_check
        _
      $region30: #{tpu_custom_call.1} parent=5 // pred_check_branch
        %174 = sbr.rel (%p171) target = $region32
      $region31: #{tpu_custom_call.1} parent=5 // pred_region
        %s175 = ssub.s32 %s17, 1
        // Predicated region
        $region33: #{tpu_custom_call.1} parent=31 // pred_check
          %p176 = pneg %p38
        $region34: #{tpu_custom_call.1} parent=31 // pred_check_branch
          %178 = sbr.rel (%p176) target = $region36
        $region35: #{tpu_custom_call.1} parent=31 // pred_region
          %179 = dma.done [#allocation5], 16
        $region36: #{tpu_custom_call.1} parent=31 // pred_fallthru
          _
        // Predicated region
        $region37: #{tpu_custom_call.1} parent=31 // pred_check
          %p180 = pneg %p59
        $region38: #{tpu_custom_call.1} parent=31 // pred_check_branch
          %182 = sbr.rel (%p180) target = $region40
        $region39: #{tpu_custom_call.1} parent=31 // pred_region
          %183 = dma.done [#allocation3], 32
        $region40: #{tpu_custom_call.1} parent=31 // pred_fallthru
          _
        %s184 = sand.u32 %s72, 1
        %s185 = scalar_lea.sflag [#allocation8], %s184
        %s186 = sand.u32 %s72, 1
        %s187 = smul.addr %s186, 8
        %s188 = scalar_lea.vmem [#allocation7], %s187
        // Predicated region
        $region41: #{tpu_custom_call.1} parent=31 // pred_check
          %p189 = pneg %p85
        $region42: #{tpu_custom_call.1} parent=31 // pred_check_branch
          %191 = sbr.rel (%p189) target = $region44
        $region43: #{tpu_custom_call.1} parent=31 // pred_region
          %192 = dma.done %s185, 128
        $region44: #{tpu_custom_call.1} parent=31 // pred_fallthru
          _
        %193 = sfence
        %p194 = pneg %p38
        %p195 = pneg %p35
        %p196 = pneg %p59
        %p197 = pneg %p56
        %s198 = sand.u32 %s72, 1
        %s199 = scalar_lea.sflag [#allocation8], %s198
        %s200 = sand.u32 %s72, 1
        %s201 = smul.addr %s200, 8
        %s202 = scalar_lea.vmem [#allocation7], %s201
        %p203 = pneg %p85
        %p204 = pneg %p82
        %p205 = pneg %p111
        %p206 = pneg %p108
        %s207 = sand.u32 %s98, 1
        %s208 = scalar_lea.sflag [#allocation4], %s207
        %s209 = sand.u32 %s98, 1
        %s210 = smul.addr %s209, 8
        %s211 = scalar_lea.vmem [#allocation9], %s210
        %v212 = vld [vmem:[%s188] sm:$0xff]
        %v214 = vcombine.high %v212, %v212
        %vm216 = vcmask 1043456
        %v217 = vsel %vm216, %v212, 0.0
        %v218 = vrot.slane %v217, 4
        %v219 = vadd.f32 %v217, %v218
        %v220 = vrot.slane %v219, 2
        %v221 = vadd.f32 %v219, %v220
        %v222 = vrot.slane %v221, 1
        %v223 = vadd.f32 %v221, %v222
        %v224 = vsel %vm216, %v214, 0.0
        %v225 = vrot.slane %v224, 4
        %v226 = vadd.f32 %v224, %v225
        %v227 = vrot.slane %v226, 2
        %v228 = vadd.f32 %v226, %v227
        %v229 = vrot.slane %v228, 1
        %v230 = vadd.f32 %v228, %v229
        %v231 = vsel %vm216, %v212, -inf
        %v232 = vrot.slane %v231, 4
        %v233 = vmax.f32 %v231, %v232
        %v234 = vrot.slane %v233, 2
        %v235 = vmax.f32 %v233, %v234
        %v236 = vrot.slane %v235, 1
        %v237 = vmax.f32 %v235, %v236
        %v238 = vsel %vm216, %v214, -inf
        %v239 = vrot.slane %v238, 4
        %v240 = vmax.f32 %v238, %v239
        %v241 = vrot.slane %v240, 2
        %v242 = vmax.f32 %v240, %v241
        %v243 = vrot.slane %v242, 1
        %v244 = vmax.f32 %v242, %v243
        %v245 = vmul.f32 %v223, 0.25
        %v246 = vmul.f32 %v230, 0.25
        %v247 = vlaneseq
        %v248 = vand.u32 %v247, 127
        %v249 = vadd.s32 %v248, 128
        %v250 = vld [vmem:[#allocation6] sm:$0x3]
        %vm251 = vcmp.ge.s32.totalorder %v248, 16
        %vm252 = vcmp.ge.s32.totalorder %v249, 16
        %vm253 = vcmp.lt.s32.totalorder %v248, 240
        %vm254 = vcmp.lt.s32.totalorder %v249, 240
        %vm255 = vcmp.ge.s32.totalorder %v250, 1
        %vm256 = vcmp.le.s32.totalorder %v250, 14
        %s257 = sld [smem:[#allocation2 + $0x12]]
        %v258 = vstv %s257
        %v259 = vadd.f32 %v258, 0.0
        %s260 = sld [smem:[#allocation2]]
        %s261 = sld [smem:[#allocation2 + $0x9]]
        %v262 = vstv %s260
        %v263 = vmul.f32 %v262, %v245
        %v264 = vmul.f32 %v262, %v246
        %v265 = vstv %s261
        %v266 = vmul.f32 %v265, %v237
        %v267 = vmul.f32 %v265, %v244
        %v268 = vadd.f32 %v263, %v266
        %v269 = vadd.f32 %v264, %v267
        %270 = vrot.lane.b32.xlu0 %v268, 17
        %v271 = vpop.permute.xlu0 %270
        %272 = vrot.lane.b32.xlu0 %v269, 17
        %v273 = vpop.permute.xlu0 %272
        %vm274 = vcmp.lt.s32.totalorder %v248, 17
        %v275 = vsel %vm274, %v271, %v273
        %v276 = vsel %vm274, %v273, %v271
        %v277 = vsel %vm255, 1, 0
        %v278 = vlaneseq
        %v279 = vshrl.u32 %v278, 7
        %v280 = vsub.s32 0, %v279
        %v281 = vrot.slane %v277, %v280
        %v282 = vlaneseq
        %v283 = vshrl.u32 %v282, 7
        %v284 = vsub.s32 1, %v283
        %v285 = vrot.slane %v277, %v284
        %vm286 = vcmp.ne.s32.totalorder %v281, 0
        %vm287 = vcmp.ne.s32.totalorder %v285, 0
        %vm288 = vmand %vm251, %vm286
        %vm289 = vmand %vm252, %vm287
        %v290 = vsel %vm288, %v276, 0.0
        %v291 = vsel %vm289, %v275, 0.0
        %v292 = vadd.f32 %v259, %v290
        %v293 = vadd.f32 %v259, %v291
        %s294 = sld [smem:[#allocation2 + $0x1]]
        %s295 = sld [smem:[#allocation2 + $0xa]]
        %v296 = vstv %s294
        %v297 = vmul.f32 %v296, %v245
        %v298 = vmul.f32 %v296, %v246
        %v299 = vstv %s295
        %v300 = vmul.f32 %v299, %v237
        %v301 = vmul.f32 %v299, %v244
        %v302 = vadd.f32 %v297, %v300
        %v303 = vadd.f32 %v298, %v301
        %304 = vrot.lane.b32.xlu0 %v302, 16
        %v305 = vpop.permute.xlu0 %304
        %306 = vrot.lane.b32.xlu0 %v303, 16
        %v307 = vpop.permute.xlu0 %306
        %vm308 = vcmp.lt.s32.totalorder %v248, 16
        %v309 = vsel %vm308, %v305, %v307
        %v310 = vsel %vm308, %v307, %v305
        %v311 = vsel %vm251, %v310, 0.0
        %v312 = vsel %vm252, %v309, 0.0
        %v313 = vadd.f32 %v292, %v311
        %v314 = vadd.f32 %v293, %v312
        %s315 = sld [smem:[#allocation2 + $0x2]]
        %s316 = sld [smem:[#allocation2 + $0xb]]
        %v317 = vstv %s315
        %v318 = vmul.f32 %v317, %v245
        %v319 = vmul.f32 %v317, %v246
        %v320 = vstv %s316
        %v321 = vmul.f32 %v320, %v237
        %v322 = vmul.f32 %v320, %v244
        %v323 = vadd.f32 %v318, %v321
        %v324 = vadd.f32 %v319, %v322
        %325 = vrot.lane.b32.xlu0 %v323, 15
        %v326 = vpop.permute.xlu0 %325
        %327 = vrot.lane.b32.xlu0 %v324, 15
        %v328 = vpop.permute.xlu0 %327
        %vm329 = vcmp.lt.s32.totalorder %v248, 15
        %v330 = vsel %vm329, %v326, %v328
        %v331 = vsel %vm329, %v328, %v326
        %v332 = vsel %vm256, 1, 0
        %v333 = vlaneseq
        %v334 = vshrl.u32 %v333, 7
        %v335 = vsub.s32 0, %v334
        %v336 = vrot.slane %v332, %v335
        %v337 = vlaneseq
        %v338 = vshrl.u32 %v337, 7
        %v339 = vsub.s32 1, %v338
        %v340 = vrot.slane %v332, %v339
        %vm341 = vcmp.ne.s32.totalorder %v336, 0
        %vm342 = vcmp.ne.s32.totalorder %v340, 0
        %vm343 = vmand %vm251, %vm341
        %vm344 = vmand %vm252, %vm342
        %v345 = vsel %vm343, %v331, 0.0
        %v346 = vsel %vm344, %v330, 0.0
        %v347 = vadd.f32 %v313, %v345
        %v348 = vadd.f32 %v314, %v346
        %s349 = sld [smem:[#allocation2 + $0x3]]
        %s350 = sld [smem:[#allocation2 + $0xc]]
        %v351 = vstv %s349
        %v352 = vmul.f32 %v351, %v245
        %v353 = vmul.f32 %v351, %v246
        %v354 = vstv %s350
        %v355 = vmul.f32 %v354, %v237
        %v356 = vmul.f32 %v354, %v244
        %v357 = vadd.f32 %v352, %v355
        %v358 = vadd.f32 %v353, %v356
        %359 = vrot.lane.b32.xlu0 %v357, 1
        %v360 = vpop.permute.xlu0 %359
        %361 = vrot.lane.b32.xlu0 %v358, 1
        %v362 = vpop.permute.xlu0 %361
        %vm363 = vcmp.lt.s32.totalorder %v248, 1
        %v364 = vsel %vm363, %v360, %v362
        %v365 = vsel %vm363, %v362, %v360
        %v368 = vcombine.low %v365, %v364
        %v370 = vunpack.c.l.s4 1966171168
        %v371 = vunpack.c.0.s8 %v370
        %v372 = vlaneseq
        %v373 = vshrl.u32 %v372, 7
        %v374 = vsub.s32 %v371, %v373
        %v375 = vrot.slane %v368, %v374
        %v377 = vunpack.c.l.s4 1966171168
        %v378 = vunpack.c.0.s8 %v377
        %v379 = vlaneseq
        %v380 = vshrl.u32 %v379, 7
        %v381 = vsub.s32 %v378, %v380
        %v382 = vrot.slane %v375, %v381
        %v384 = vsel %vm255, %v382, 0.0
        %v386 = vlaneseq
        %v387 = vshrl.u32 %v386, 7
        %v388 = vsub.s32 0, %v387
        %v389 = vrot.slane %v384, %v388
        %v390 = vlaneseq
        %v391 = vshrl.u32 %v390, 7
        %v392 = vsub.s32 1, %v391
        %v393 = vrot.slane %v384, %v392
        %v396 = vadd.f32 %v347, %v389
        %v397 = vadd.f32 %v348, %v393
        %s398 = sld [smem:[#allocation2 + $0x4]]
        %s399 = sld [smem:[#allocation2 + $0xd]]
        %v400 = vstv %s398
        %v401 = vmul.f32 %v400, %v245
        %v402 = vmul.f32 %v400, %v246
        %v403 = vstv %s399
        %v404 = vmul.f32 %v403, %v237
        %v405 = vmul.f32 %v403, %v244
        %v406 = vadd.f32 %v401, %v404
        %v407 = vadd.f32 %v402, %v405
        %v408 = vadd.f32 %v396, %v406
        %v409 = vadd.f32 %v397, %v407
        %s410 = sld [smem:[#allocation2 + $0x5]]
        %s411 = sld [smem:[#allocation2 + $0xe]]
        %v412 = vstv %s410
        %v413 = vmul.f32 %v412, %v245
        %v414 = vmul.f32 %v412, %v246
        %v415 = vstv %s411
        %v416 = vmul.f32 %v415, %v237
        %v417 = vmul.f32 %v415, %v244
        %v418 = vadd.f32 %v413, %v416
        %v419 = vadd.f32 %v414, %v417
        %420 = vrot.lane.b32.xlu0 %v418, 127
        %v421 = vpop.permute.xlu0 %420
        %422 = vrot.lane.b32.xlu0 %v419, 127
        %v423 = vpop.permute.xlu0 %422
        %vm424 = vcmp.lt.s32.totalorder %v248, 127
        %v425 = vsel %vm424, %v421, %v423
        %v426 = vsel %vm424, %v423, %v421
        %v429 = vcombine.low %v425, %v426
        %v431 = vunpack.c.l.s4 1966171168
        %v432 = vunpack.c.0.s8 %v431
        %v433 = vlaneseq
        %v434 = vshrl.u32 %v433, 7
        %v435 = vsub.s32 %v432, %v434
        %v436 = vrot.slane %v429, %v435
        %v438 = vunpack.c.l.s4 1966171168
        %v439 = vunpack.c.0.s8 %v438
        %v440 = vlaneseq
        %v441 = vshrl.u32 %v440, 7
        %v442 = vsub.s32 %v439, %v441
        %v443 = vrot.slane %v436, %v442
        %v445 = vsel %vm256, %v443, 0.0
        %v447 = vlaneseq
        %v448 = vshrl.u32 %v447, 7
        %v449 = vsub.s32 0, %v448
        %v450 = vrot.slane %v445, %v449
        %v451 = vlaneseq
        %v452 = vshrl.u32 %v451, 7
        %v453 = vsub.s32 1, %v452
        %v454 = vrot.slane %v445, %v453
        %v457 = vadd.f32 %v408, %v450
        %v458 = vadd.f32 %v409, %v454
        %s459 = sld [smem:[#allocation2 + $0x6]]
        %s460 = sld [smem:[#allocation2 + $0xf]]
        %v461 = vstv %s459
        %v462 = vmul.f32 %v461, %v245
        %v463 = vmul.f32 %v461, %v246
        %v464 = vstv %s460
        %v465 = vmul.f32 %v464, %v237
        %v466 = vmul.f32 %v464, %v244
        %v467 = vadd.f32 %v462, %v465
        %v468 = vadd.f32 %v463, %v466
        %469 = vrot.lane.b32.xlu0 %v467, 113
        %v470 = vpop.permute.xlu0 %469
        %471 = vrot.lane.b32.xlu0 %v468, 113
        %v472 = vpop.permute.xlu0 %471
        %vm473 = vcmp.lt.s32.totalorder %v248, 113
        %v474 = vsel %vm473, %v470, %v472
        %v475 = vsel %vm473, %v472, %v470
        %vm476 = vmand %vm253, %vm286
        %vm477 = vmand %vm254, %vm287
        %v478 = vsel %vm476, %v474, 0.0
        %v479 = vsel %vm477, %v475, 0.0
        %v480 = vadd.f32 %v457, %v478
        %v481 = vadd.f32 %v458, %v479
        %s482 = sld [smem:[#allocation2 + $0x7]]
        %s483 = sld [smem:[#allocation2 + $0x10]]
        %v484 = vstv %s482
        %v485 = vmul.f32 %v484, %v245
        %v486 = vmul.f32 %v484, %v246
        %v487 = vstv %s483
        %v488 = vmul.f32 %v487, %v237
        %v489 = vmul.f32 %v487, %v244
        %v490 = vadd.f32 %v485, %v488
        %v491 = vadd.f32 %v486, %v489
        %492 = vrot.lane.b32.xlu0 %v490, 112
        %v493 = vpop.permute.xlu0 %492
        %494 = vrot.lane.b32.xlu0 %v491, 112
        %v495 = vpop.permute.xlu0 %494
        %vm496 = vcmp.lt.s32.totalorder %v248, 112
        %v497 = vsel %vm496, %v493, %v495
        %v498 = vsel %vm496, %v495, %v493
        %v499 = vsel %vm253, %v497, 0.0
        %v500 = vsel %vm254, %v498, 0.0
        %v501 = vadd.f32 %v480, %v499
        %v502 = vadd.f32 %v481, %v500
        %s503 = sld [smem:[#allocation2 + $0x8]]
        %s504 = sld [smem:[#allocation2 + $0x11]]
        %v505 = vstv %s503
        %v506 = vmul.f32 %v505, %v245
        %v507 = vmul.f32 %v505, %v246
        %v508 = vstv %s504
        %v509 = vmul.f32 %v508, %v237
        %v510 = vmul.f32 %v508, %v244
        %v511 = vadd.f32 %v506, %v509
        %v512 = vadd.f32 %v507, %v510
        %513 = vrot.lane.b32.xlu0 %v511, 111
        %v514 = vpop.permute.xlu0 %513
        %515 = vrot.lane.b32.xlu0 %v512, 111
        %v516 = vpop.permute.xlu0 %515
        %vm517 = vcmp.lt.s32.totalorder %v248, 111
        %v518 = vsel %vm517, %v514, %v516
        %v519 = vsel %vm517, %v516, %v514
        %vm520 = vmand %vm253, %vm341
        %vm521 = vmand %vm254, %vm342
        %v522 = vsel %vm520, %v518, 0.0
        %v523 = vsel %vm521, %v519, 0.0
        %v524 = vadd.f32 %v501, %v522
        %v525 = vadd.f32 %v502, %v523
        %v526 = vsub.f32 0.0, %v524
        %v527 = vsub.f32 0.0, %v525
        %v528 = vmul.f32 %v526, 1.442695
        %v529 = vpow.pop %v528
        %v530 = vmul.f32 %v527, 1.442695
        %v531 = vpow.pop %v530
        %v532 = vadd.f32 %v529, 1.0
        %v533 = vadd.f32 %v531, 1.0
        %v534 = vrcp.pop %v532
        %v535 = vrcp.pop %v533
        %v536 = vlaneseq
        %v537 = vshrl.u32 %v536, 7
        %v538 = vsub.s32 0, %v537
        %v539 = vrot.slane %v534, %v538
        %v540 = vlaneseq
        %v541 = vshrl.u32 %v540, 7
        %v542 = vsub.s32 0, %v541
        %v543 = vrot.slane %v535, %v542
        %v546 = vcombine.low %v539, %v543
        %v548 = vmul.f32 %v212, %v546
        %549 = vst [vmem:[%s211] sm:$0xff] %v548
        %s550 = sand.u32 %s98, 1
        %s551 = scalar_lea.sflag [#allocation4], %s550
        %s552 = sand.u32 %s98, 1
        %s553 = smul.addr %s552, 8
        %s554 = scalar_lea.vmem [#allocation9], %s553
        // Predicated region
        $region45: #{tpu_custom_call.1} parent=31 // pred_check
          %p555 = pneg %p108
        $region46: #{tpu_custom_call.1} parent=31 // pred_check_branch
          %557 = sbr.rel (%p555) target = $region48
        $region47: #{tpu_custom_call.1} parent=31 // pred_region
          %s559 = ssub.s32 128, 128
          %560 = vsyncadd %s551, %s559
          %s561 = smul.addr %s22, 2
          %s562 = smul.addr %s561, 64
          %s563 = scalar_lea.hbm %s3, %s562
          %s565 = sshll.u32 %s554, 4
          %s566 = int_to_ptr.vmem [resolvable:$true] %s565
          %568 = dma.vmem_to_hbm [thread:$0]  %s566, 128, %s563, %s551
        $region48: #{tpu_custom_call.1} parent=31 // pred_fallthru
          _
      $region32: #{tpu_custom_call.1} parent=5 // pred_fallthru
        _
      %p569 = scmp.le.s32.totalorder 2, %s17
      // Predicated region
      $region49: #{tpu_custom_call.1} parent=5 // pred_check
        %p570 = pneg %p569
      $region50: #{tpu_custom_call.1} parent=5 // pred_check_branch
        %572 = sbr.rel (%p570) target = $region52
      $region51: #{tpu_custom_call.1} parent=5 // pred_region
        %s573 = ssub.s32 %s17, 2
        // Predicated region
        $region53: #{tpu_custom_call.1} parent=51 // pred_check
          %p574 = pneg %p114
        $region54: #{tpu_custom_call.1} parent=51 // pred_check_branch
          %576 = sbr.rel (%p574) target = $region56
        $region55: #{tpu_custom_call.1} parent=51 // pred_region
          %s577 = sand.u32 %s99, 1
          %s578 = scalar_lea.sflag [#allocation4], %s577
          %s579 = sand.u32 %s99, 1
          %s580 = smul.addr %s579, 8
          %s581 = scalar_lea.vmem [#allocation9], %s580
          %582 = dma.done %s578, 128
        $region56: #{tpu_custom_call.1} parent=51 // pred_fallthru
          _
      $region52: #{tpu_custom_call.1} parent=5 // pred_fallthru
        _
    $region6: #{tpu_custom_call.1} parent=1 // loop_footer
      %s21 = sadd.s32 1, %s17
    $region7: #{tpu_custom_call.1} parent=1 // loop_footer_branch
      %16 = sbr.rel target = $region3
    $region8: #{tpu_custom_call.1} parent=1 // loop_exit
      _
    %583 = vsyncpa [#allocation3], 1
    %s584 = scalar_lea.sflag [#allocation3], 1
    %585 = vsyncpa %s584, 1
    %586 = vsyncpa [#allocation8], 1
    %s587 = scalar_lea.sflag [#allocation8], 1
    %588 = vsyncpa %s587, 1
    %589 = vsyncpa [#allocation4], 1
    %s590 = scalar_lea.sflag [#allocation4], 1
    %591 = vsyncpa %s590, 1
    %592 = vsyncpa [#allocation5], 1
    %s593 = scalar_lea.sflag [#allocation5], 1
    %594 = vsyncpa %s593, 1

</llo_original>
